<compile_context>
chip_gen: v6e
topology: v6e:2x2x1
jax: 0.10.0
libtpu: 0.0.40
codegen_flags: <defaults>
</compile_context>

<pallas_src>
import functools

import jax
import jax.numpy as jnp
from jax.experimental import pallas as pl
from jax.experimental.pallas import tpu as pltpu


_TILE_FLOOR_BYTES = 1 << 20              # ~1 MiB / tile: ~85%-of-roofline knee
_FALLBACK_VMEM_CAP = 64 * 1024 * 1024    # v7x per-core VMEM: safe everywhere


def _cdiv(a, b):
    return -(-a // b)


def _round_up(v, m):
    return ((v + m - 1) // m) * m


def _device_info():
    """Returns (vmem_capacity_bytes, multi_tensorcore, generation)."""
    vmem = None
    try:
        vmem = int(pltpu.get_tpu_info().vmem_capacity_bytes)
    except Exception:
        pass
    gen = None
    multi_tc = False
    try:
        kind = jax.devices()[0].device_kind.lower()
        for g in (7, 6, 5, 4):
            if ("v%d" % g) in kind:
                gen = g
                break
        # Chips with 2 TensorCores per device shard the "parallel" grid axis.
        multi_tc = ("v7" in kind) or ("v4" in kind) or ("v5p" in kind)
    except Exception:
        pass
    if vmem is None:
        vmem = _FALLBACK_VMEM_CAP if (gen is None or gen >= 7) else 128 * 1024 * 1024
    return vmem, multi_tc, gen


def _rmsnorm_kernel(x_ref, w_ref, o_ref, *, eps, low_precision_epilogue):
    # x_ref: (tm, H) token tile; w_ref: (1, H) weight row; o_ref: (tm, H).
    x = x_ref[...].astype(jnp.float32)
    var = jnp.mean(x * x, axis=-1, keepdims=True)               # (tm, 1)
    inv = jax.lax.rsqrt(var + eps)                              # (tm, 1)
    # Match torch exactly: cast the normalized value back to the *input*
    # dtype before multiplying by the weight.
    normed = (x * inv).astype(x_ref.dtype)
    if low_precision_epilogue:
        # input dtype == weight dtype == output dtype (bf16): multiply directly.
        o_ref[...] = (w_ref[...] * normed).astype(o_ref.dtype)
    else:
        out = w_ref[...].astype(jnp.float32) * normed.astype(jnp.float32)
        o_ref[...] = out.astype(o_ref.dtype)


def _choose_block_rows(n_tokens, hidden, in_b, out_b, tile_budget, multi_tc):
    """Pick a token-tile height: as tall as the VMEM budget allows, only
    splitting further when it helps multi-TC sharding and each tile stays
    above the HBM-roofline floor."""
    # Per-row VMEM estimate: double-buffered in/out tiles + ~2 f32 temporaries.
    per_row = hidden * (2 * in_b + 2 * out_b + 2 * 4)
    rows = max(1, tile_budget // per_row)
    pack = max(8, 32 // in_b)               # sublane pack: 8 f32 / 16 bf16 / 32 i8
    rows = max(pack, (rows // pack) * pack)

    buf_bytes_per_row = hidden * max(in_b, out_b)

    if n_tokens <= rows:
        # Everything fits in one block.  On multi-TC chips split into 2 even
        # steps iff each half-tile still sits above the roofline knee.
        if multi_tc and n_tokens >= 2 * pack:
            half = _round_up(_cdiv(n_tokens, 2), pack)
            if half < n_tokens and half * buf_bytes_per_row >= _TILE_FLOOR_BYTES:
                return half
        return n_tokens

    # Multiple steps required by the VMEM budget: on multi-TC chips prefer an
    # even step count so neither core idles, but never drop below the floor.
    if multi_tc:
        steps = _cdiv(n_tokens, rows)
        if steps % 2 == 1:
            new_rows = _round_up(_cdiv(n_tokens, steps + 1), pack)
            if (new_rows >= pack
                    and _cdiv(n_tokens, new_rows) % 2 == 0
                    and new_rows * buf_bytes_per_row >= _TILE_FLOOR_BYTES):
                rows = new_rows
    return rows


def rmsnorm(x, weight, eps=1e-6, *, block_rows=None):
    """x: (..., hidden), weight: (hidden,). Returns promote(x, weight) dtype."""
    orig_shape = x.shape
    hidden = orig_shape[-1]
    x2d = x.reshape(-1, hidden)
    n_tokens = x2d.shape[0]

    out_dtype = jnp.result_type(x.dtype, weight.dtype)
    if n_tokens == 0:
        return jnp.zeros(orig_shape, dtype=out_dtype)

    in_b = jnp.dtype(x.dtype).itemsize
    out_b = jnp.dtype(out_dtype).itemsize
    pack = max(8, 32 // in_b)

    vmem_cap, multi_tc, gen = _device_info()
    vmem_limit = (vmem_cap * 3) // 4          # ~96 MiB v5e/v6e, ~48 MiB v7x
    tile_budget = vmem_limit // 2

    if block_rows is None:
        block_rows = _choose_block_rows(n_tokens, hidden, in_b, out_b,
                                        tile_budget, multi_tc)
    else:
        # Keep user-supplied sizes layout-legal: pack multiple or full dim.
        block_rows = min(_round_up(max(1, block_rows), pack), n_tokens)

    # bf16 epilogue only where the VPU is natively bf16 (v6e / v7x) and the
    # promoted output dtype equals the input dtype.
    low_prec = (x.dtype == jnp.bfloat16 and out_dtype == jnp.bfloat16
                and gen is not None and gen >= 6)

    w2d = weight.reshape(1, hidden)
    grid = (_cdiv(n_tokens, block_rows),)     # edge block padded by Pallas

    out = pl.pallas_call(
        functools.partial(_rmsnorm_kernel, eps=eps,
                          low_precision_epilogue=low_prec),
        out_shape=jax.ShapeDtypeStruct((n_tokens, hidden), out_dtype),
        grid_spec=pltpu.PrefetchScalarGridSpec(
            num_scalar_prefetch=0,
            grid=grid,
            in_specs=[
                pl.BlockSpec((block_rows, hidden), lambda i: (i, 0)),
                pl.BlockSpec((1, hidden), lambda i: (0, 0)),
            ],
            out_specs=pl.BlockSpec((block_rows, hidden), lambda i: (i, 0)),
        ),
        compiler_params=pltpu.CompilerParams(
            dimension_semantics=("parallel",),
            vmem_limit_bytes=int(vmem_limit),
        ),
    )(x2d, w2d)

    return out.reshape(orig_shape[:-1] + (hidden,))


def rmsnorm_ref(x, weight, eps=1e-6):
    """Pure-JAX reference matching the PyTorch module."""
    input_dtype = x.dtype
    xf = x.astype(jnp.float32)
    var = jnp.mean(xf * xf, axis=-1, keepdims=True)
    xn = xf * jax.lax.rsqrt(var + eps)
    return weight * xn.astype(input_dtype)


if __name__ == "__main__":
    key = jax.random.PRNGKey(0)
    k_x, k_w, k_x2 = jax.random.split(key, 3)

    # Case 1: f32, the shape implied by the module test (batch=2, seq=8, hidden=32).
    batch, seq, hidden = 2, 8, 32
    x = jax.random.normal(k_x, (batch, seq, hidden), dtype=jnp.float32)
    # weight ~ Normal(mean=1.0, std=0.1), matching the torch init deterministically.
    weight = 1.0 + 0.1 * jax.random.normal(k_w, (hidden,), dtype=jnp.float32)

    out = jax.block_until_ready(rmsnorm(x, weight, eps=1e-6))
    ref = rmsnorm_ref(x, weight, eps=1e-6)
    assert out.shape == ref.shape and out.dtype == ref.dtype
    assert jnp.allclose(out, ref, atol=1e-5, rtol=1e-5), "f32 mismatch vs reference"

    # Case 2: small bf16 input/weight to exercise the low-precision epilogue.
    hidden2 = 128
    x2 = jax.random.normal(k_x2, (4, hidden2), dtype=jnp.float32).astype(jnp.bfloat16)
    w2 = (1.0 + 0.1 * jax.random.normal(k_w, (hidden2,), dtype=jnp.float32)
          ).astype(jnp.bfloat16)
    out2 = jax.block_until_ready(rmsnorm(x2, w2, eps=1e-6))
    ref2 = rmsnorm_ref(x2, w2, eps=1e-6)
    assert out2.shape == ref2.shape and out2.dtype == ref2.dtype
    assert jnp.allclose(out2.astype(jnp.float32), ref2.astype(jnp.float32),
                        atol=2e-2, rtol=2e-2), "bf16 mismatch vs reference"

    print("KERNEL_OK")
</pallas_src>

<mosaic_0001>
module attributes {stable_mosaic.version = 11 : i64} {
  func.func @_rmsnorm_kernel(%arg0: i32, %arg1: memref<16x32xf32, #tpu.memory_space<vmem>>, %arg2: memref<1x32xf32, #tpu.memory_space<vmem>>, %arg3: memref<16x32xf32, #tpu.memory_space<vmem>>) attributes {dimension_semantics = [#tpu.dimension_semantics<parallel>], iteration_bounds = array<i64: 1>, scalar_prefetch = 0 : i64, scratch_operands = 0 : i64, tpu.core_type = #tpu.core_type<tc>, window_params = [{transform_indices = @transform_0, window_bounds = array<i64: 16, 32>}, {pipeline_mode = #tpu.pipeline_mode<synchronous>, transform_indices = @transform_1, window_bounds = array<i64: 1, 32>}, {transform_indices = @transform_2, window_bounds = array<i64: 16, 32>}]} {
    %c0 = arith.constant 0 : index
    %c0_0 = arith.constant 0 : index
    %0 = vector.load %arg1[%c0, %c0_0] : memref<16x32xf32, #tpu.memory_space<vmem>>, vector<16x32xf32>
    %1 = arith.mulf %0, %0 : vector<16x32xf32>
    %cst = arith.constant dense<0.000000e+00> : vector<16xf32>
    %2 = vector.multi_reduction <add>, %1, %cst [1] : vector<16x32xf32> to vector<16xf32>
    %3 = vector.shape_cast %2 : vector<16xf32> to vector<16x1xf32>
    %cst_1 = arith.constant 3.200000e+01 : f32
    %4 = vector.broadcast %cst_1 : f32 to vector<16x1xf32>
    %5 = arith.divf %3, %4 : vector<16x1xf32>
    %cst_2 = arith.constant 9.99999997E-7 : f32
    %6 = vector.broadcast %cst_2 : f32 to vector<16x1xf32>
    %7 = arith.addf %5, %6 : vector<16x1xf32>
    %8 = math.rsqrt %7 : vector<16x1xf32>
    %9 = vector.broadcast %8 : vector<16x1xf32> to vector<16x32xf32>
    %10 = arith.mulf %0, %9 : vector<16x32xf32>
    %c0_3 = arith.constant 0 : index
    %c0_4 = arith.constant 0 : index
    %11 = vector.load %arg2[%c0_3, %c0_4] : memref<1x32xf32, #tpu.memory_space<vmem>>, vector<1x32xf32>
    %12 = vector.broadcast %11 : vector<1x32xf32> to vector<16x32xf32>
    %13 = arith.mulf %12, %10 : vector<16x32xf32>
    %c0_5 = arith.constant 0 : index
    %c0_6 = arith.constant 0 : index
    %14 = vector.load %arg3[%c0_5, %c0_6] : memref<16x32xf32, #tpu.memory_space<vmem>>, vector<16x32xf32>
    tpu.vector_store %arg3[%c0_5, %c0_6], %13 {strides = array<i32>} : memref<16x32xf32, #tpu.memory_space<vmem>>, vector<16x32xf32>,
    return
  }
  func.func @transform_0(%arg0: i32) -> (i32, i32) {
    %c0_i32 = arith.constant 0 : i32
    %c0_i32_0 = arith.constant 0 : i32
    return %arg0, %c0_i32 : i32, i32
  }
  func.func @transform_1(%arg0: i32) -> (i32, i32) {
    %c0_i32 = arith.constant 0 : i32
    %c0_i32_0 = arith.constant 0 : i32
    %c0_i32_1 = arith.constant 0 : i32
    return %c0_i32, %c0_i32_0 : i32, i32
  }
  func.func @transform_2(%arg0: i32) -> (i32, i32) {
    %c0_i32 = arith.constant 0 : i32
    %c0_i32_0 = arith.constant 0 : i32
    return %arg0, %c0_i32 : i32, i32
  }
}

</mosaic_0001>

<llo_original>
// kernel: tpu_custom_call.1
$region0: #{tpu_custom_call.1}
  #allocation0 [shape = 'u32[]', space=smem, size = 0x4, offset = 0x4, fixed_abs, tag = 'smem constant byte address 0x4 - core index']
  #allocation1 [shape = 'u32[144,128]{1,0:T(1,128)}', space=vmem, size = 0x12000, scoped, tag = 'internal scratch']
  %s0 = inlined_call_operand.hbm [shape: f32[16,32], index: 0, kind: input, shape index: {}]
  %s1 = inlined_call_operand.vmem [shape: f32[1,32], index: 1, kind: input, shape index: {}]
  %s2 = inlined_call_operand.hbm [shape: f32[16,32], index: 2, kind: output, shape index: {}]
  %s3 = sld [smem:[#allocation0]]
  $region22: #{tpu_custom_call.1} parent=0
    _
  %s5 = ssub.s32 1, %s3
  %s6 = scalar_select 0, %s5, %s3
  $region1: #{tpu_custom_call.1} parent=0
    #allocation2 [shape = 'u8[8192]{0}', space=vmem, size = 0x2000, scoped, tag = 'input window, operand 0, single buffered']
    #allocation3 [shape = 's32[1]{0}', space=sflag, size = 0x4, scoped, tag = 'scoped memory for tpu_custom_call.1']
    #allocation4 [shape = 's32[1]{0}', space=sflag, size = 0x4, scoped, tag = 'scoped memory for tpu_custom_call.1']
    #allocation5 [shape = 'u8[8192]{0}', space=vmem, size = 0x2000, scoped, tag = 'output window, operand 0, single buffered']
    %7 = vsyncpa [#allocation3], 0
    %8 = vsyncpa [#allocation4], 0
    // Predicated region
    $region2: #{tpu_custom_call.1} parent=1 // pred_check
      _
    $region3: #{tpu_custom_call.1} parent=1 // pred_check_branch
      %10 = sbr.rel (0) target = $region5
    $region4: #{tpu_custom_call.1} parent=1 // pred_region
      %s12 = ssub.s32 256, 256
      %13 = vsyncadd [#allocation3], %s12
      %s14 = sshll.u32 [#allocation2], 4
      %s15 = int_to_ptr.vmem [resolvable:$true] %s14
      %20 = dma.hbm_to_vmem [thread:$0]  %s0, 256, %s15, [#allocation3], 128, 128, 8
    $region5: #{tpu_custom_call.1} parent=1 // pred_fallthru
      _
    // Predicated region
    $region6: #{tpu_custom_call.1} parent=1 // pred_check
      _
    $region7: #{tpu_custom_call.1} parent=1 // pred_check_branch
      %22 = sbr.rel (0) target = $region9
    $region8: #{tpu_custom_call.1} parent=1 // pred_region
      _
    $region9: #{tpu_custom_call.1} parent=1 // pred_fallthru
      _
    // Predicated region
    $region10: #{tpu_custom_call.1} parent=1 // pred_check
      _
    $region11: #{tpu_custom_call.1} parent=1 // pred_check_branch
      %24 = sbr.rel (0) target = $region13
    $region12: #{tpu_custom_call.1} parent=1 // pred_region
      %25 = dma.done [#allocation3], 256
    $region13: #{tpu_custom_call.1} parent=1 // pred_fallthru
      _
    %v26 = vld [vmem:[#allocation2] sm:$0xff]
    %v27 = vld [vmem:[#allocation2 + $0x8] sm:$0xff]
    %v28 = vmul.f32 %v26, %v26
    %v29 = vmul.f32 %v27, %v27
    %vm30 = vcmask 261120
    %v31 = vsel %vm30, %v28, 0.0
    %32 = vadd.xlane.f32.xlu0 %v31
    %v33 = vpop.xlane.xlu0 %32
    %v34 = vsel %vm30, %v29, 0.0
    %35 = vadd.xlane.f32.xlu0 %v34
    %v36 = vpop.xlane.xlu0 %35
    %v37 = vrcp.pop 32.0
    %v38 = vmul.f32 %v33, %v37
    %v39 = vmul.f32 %v36, %v37
    %v40 = vadd.f32 %v38, 1e-06
    %v41 = vadd.f32 %v39, 1e-06
    %v42 = vrsqrt.pop %v40
    %v43 = vrsqrt.pop %v41
    %v44 = vmul.f32 %v26, %v42
    %v45 = vmul.f32 %v27, %v43
    %v46 = vld [vmem:[%s1] sm:$0x1]
    %v48 = vlaneseq
    %v49 = vshrl.u32 %v48, 7
    %v50 = vsub.s32 0, %v49
    %v51 = vrot.slane %v46, %v50
    %v53 = vmul.f32 %v51, %v44
    %v54 = vmul.f32 %v51, %v45
    %55 = vst.msk [vmem:[#allocation5] sm:$0xff] %vm30, %v53
    %56 = vst.msk [vmem:[#allocation5 + $0x8] sm:$0xff] %vm30, %v54
    // Predicated region
    $region14: #{tpu_custom_call.1} parent=1 // pred_check
      _
    $region15: #{tpu_custom_call.1} parent=1 // pred_check_branch
      %58 = sbr.rel (0) target = $region17
    $region16: #{tpu_custom_call.1} parent=1 // pred_region
      %s60 = ssub.s32 256, 256
      %61 = vsyncadd [#allocation4], %s60
      %s62 = sshll.u32 [#allocation5], 4
      %s63 = int_to_ptr.vmem [resolvable:$true] %s62
      %68 = dma.vmem_to_hbm [thread:$0]  %s63, 256, %s2, [#allocation4], 128, 128, 8
    $region17: #{tpu_custom_call.1} parent=1 // pred_fallthru
      _
    // Predicated region
    $region18: #{tpu_custom_call.1} parent=1 // pred_check
      _
    $region19: #{tpu_custom_call.1} parent=1 // pred_check_branch
      %70 = sbr.rel (0) target = $region21
    $region20: #{tpu_custom_call.1} parent=1 // pred_region
      %71 = dma.done [#allocation4], 256
    $region21: #{tpu_custom_call.1} parent=1 // pred_fallthru
      _
    %72 = vsyncpa [#allocation3], 1
    %73 = vsyncpa [#allocation4], 1

</llo_original>
